<compile_context>
chip_gen: v7x
topology: tpu7x:2x2x1
jax: 0.10.0
libtpu: 0.0.40
codegen_flags: <defaults>
</compile_context>

<pallas_src>
import functools

import jax
import jax.numpy as jnp
from jax.experimental import pallas as pl
from jax.experimental.pallas import tpu as pltpu

_SUBLANE = 8


def _fused_mlp_kernel(x_ref, *refs):
    """refs = (w0, b0, w1, b1, ..., out_ref).  All layers fused in one kernel."""
    out_ref = refs[-1]
    params = refs[:-1]
    n_layers = len(params) // 2

    h = x_ref[...]                               # (tb, Din), stays on-chip
    for i in range(n_layers):                    # unrolled at trace time
        w = params[2 * i][...]                   # (Din_i, Dout_i)
        b = params[2 * i + 1][...]               # (1, Dout_i)  f32
        h = jnp.dot(h, w, preferred_element_type=jnp.float32)  # MXU, f32 acc
        h = jnp.maximum(h + b, 0.0)              # bias + ReLU in f32
    out_ref[...] = h.astype(out_ref.dtype)


def prepare_params(params, weight_dtype=jnp.float32):
    """One-time prep (outside the per-forward wrapper): reshape biases to
    (1, Dout) and optionally cast weights.  Weights are (in, out) layout."""
    flat = []
    for w, b in params:
        flat.append(jnp.asarray(w, weight_dtype))
        flat.append(jnp.asarray(b, jnp.float32).reshape(1, -1))
    return tuple(flat)


def _round_down(x, m):
    return max(m, (int(x) // m) * m)


def _pick_tb(requested_tb, batch, din, layer_out_dims, x_itemsize, out_itemsize,
             param_bytes, vmem_budget_bytes):
    """Largest batch tile <= requested that fits the VMEM budget (double-
    buffered x/out tiles + resident weights + f32 intermediates) and leaves
    >= 2 grid tiles so v7x's two TensorCores both get work."""
    dout = layer_out_dims[-1]
    per_row = (2 * din * x_itemsize            # double-buffered x tile
               + 2 * dout * out_itemsize       # double-buffered out tile
               + 4 * sum(layer_out_dims))      # f32 intermediates
    avail = max(vmem_budget_bytes - param_bytes - (2 << 20), per_row * _SUBLANE)
    tb = min(requested_tb, avail // per_row)
    tb = min(tb, -(-batch // 2))               # keep n_tiles >= 2 (v7x megacore)
    return _round_down(tb, _SUBLANE)


def implicit_interaction_forward(x, flat_params, *, tb=4096, no_grid_max=4096,
                                 out_dtype=None, vmem_budget_bytes=40 << 20):
    """Fused forward for ImplicitInteraction.

    x: (B, Din).  flat_params: (w0, b0, w1, b1, ...) from prepare_params;
    w_i is (in_i, out_i), b_i is (1, out_i)."""
    x = jax.lax.stop_gradient(x)                 # inputs.detach()
    B, Din = x.shape
    n_layers = len(flat_params) // 2
    layer_out_dims = [flat_params[2 * i].shape[1] for i in range(n_layers)]
    Dout = layer_out_dims[-1]
    out_dtype = x.dtype if out_dtype is None else jnp.dtype(out_dtype)
    x_isz = x.dtype.itemsize
    o_isz = jnp.dtype(out_dtype).itemsize

    param_bytes = sum(int(p.size) * p.dtype.itemsize for p in flat_params)
    flops = 2 * B * sum(flat_params[2 * i].shape[0] * flat_params[2 * i].shape[1]
                        for i in range(n_layers))
    cost = pl.CostEstimate(
        flops=flops,
        transcendentals=0,
        bytes_accessed=B * Din * x_isz + B * Dout * o_isz + param_bytes)
    cparams_common = dict(vmem_limit_bytes=int(vmem_budget_bytes))

    if B <= no_grid_max:
        # Single fused call, no grid: whole arrays resident in VMEM, no
        # per-step overhead at all.
        return pl.pallas_call(
            _fused_mlp_kernel,
            out_shape=jax.ShapeDtypeStruct((B, Dout), out_dtype),
            cost_estimate=cost,
            compiler_params=pltpu.CompilerParams(**cparams_common),
        )(x, *flat_params)

    # Large batch: tile the batch axis.  Weights/biases stay VMEM-resident
    # across grid steps (index_map -> (0, 0)).  No jnp.pad: Pallas masks the
    # ragged edge block's stores, so non-divisible B costs no extra HBM pass.
    tb = _pick_tb(tb, B, Din, layer_out_dims, x_isz, o_isz,
                  param_bytes, vmem_budget_bytes)
    n_tiles = pl.cdiv(B, tb)

    in_specs = [pl.BlockSpec((tb, Din), lambda i: (i, 0))]
    for li in range(n_layers):
        din_i, dout_i = flat_params[2 * li].shape
        in_specs.append(pl.BlockSpec((din_i, dout_i), lambda i: (0, 0)))
        in_specs.append(pl.BlockSpec((1, dout_i), lambda i: (0, 0)))

    return pl.pallas_call(
        _fused_mlp_kernel,
        out_shape=jax.ShapeDtypeStruct((B, Dout), out_dtype),
        grid=(n_tiles,),
        in_specs=in_specs,
        out_specs=pl.BlockSpec((tb, Dout), lambda i: (i, 0)),
        cost_estimate=cost,
        compiler_params=pltpu.CompilerParams(
            dimension_semantics=("parallel",), **cparams_common),
    )(x, *flat_params)


def init_params(key, inputs_dim, hidden_units, init_std=1e-4):
    """Mirror ImplicitInteraction.__init__: weights ~ N(0, init_std), biases
    follow torch Linear default U(-1/sqrt(fan_in), 1/sqrt(fan_in))."""
    if len(hidden_units) == 0:
        raise ValueError("hidden_units is empty!!")
    dims = [inputs_dim] + list(hidden_units)
    params = []
    for i in range(len(dims) - 1):
        key, kw, kb = jax.random.split(key, 3)
        fan_in, fan_out = dims[i], dims[i + 1]
        # PyTorch stores W as (out, in); we keep the kernel-friendly (in, out).
        w = init_std * jax.random.normal(kw, (fan_in, fan_out), dtype=jnp.float32)
        bound = 1.0 / jnp.sqrt(jnp.float32(fan_in))
        b = jax.random.uniform(kb, (fan_out,), dtype=jnp.float32,
                               minval=-bound, maxval=bound)
        params.append((w, b))
    return tuple(params)


def reference_forward(x, params):
    out = x
    for w, b in params:
        out = jnp.maximum(out @ w + b, 0.0)
    return out


if __name__ == "__main__":
    key = jax.random.PRNGKey(0)

    batch = 8
    inputs_dim = 32
    hidden_units = (64, 32)

    key, kx = jax.random.split(key)
    x = jax.random.normal(kx, (batch, inputs_dim), dtype=jnp.float32)

    params = init_params(key, inputs_dim, hidden_units)
    flat = prepare_params(params)          # one-time bias reshape (f32 weights)

    fwd = jax.jit(functools.partial(implicit_interaction_forward),
                  static_argnames=("tb", "no_grid_max"))

    # Small/moderate batch -> single fused no-grid call (whole arrays in VMEM).
    out = jax.block_until_ready(fwd(x, flat))
    ref = reference_forward(x, params)
    assert out.shape == (batch, hidden_units[-1])
    assert jnp.allclose(out, ref, atol=1e-4, rtol=1e-3), "mismatch (no-grid path)"

    # Grid path with a ragged last block (no jnp.pad), exercised at small
    # scale by lowering the thresholds: B=300, tb=128 -> 3 tiles, last masked.
    key, kx2 = jax.random.split(key)
    xb = jax.random.normal(kx2, (300, inputs_dim), dtype=jnp.float32)
    out_b = jax.block_until_ready(fwd(xb, flat, tb=128, no_grid_max=64))
    ref_b = reference_forward(xb, params)
    assert out_b.shape == (300, hidden_units[-1])
    assert jnp.allclose(out_b, ref_b, atol=1e-4, rtol=1e-3), "mismatch (grid path)"

    print("KERNEL_OK")
</pallas_src>

<mosaic_0001>
module attributes {stable_mosaic.version = 11 : i64} {
  func.func @_fused_mlp_kernel(%arg0: memref<8x32xf32, #tpu.memory_space<vmem>>, %arg1: memref<32x64xf32, #tpu.memory_space<vmem>>, %arg2: memref<1x64xf32, #tpu.memory_space<vmem>>, %arg3: memref<64x32xf32, #tpu.memory_space<vmem>>, %arg4: memref<1x32xf32, #tpu.memory_space<vmem>>, %arg5: memref<8x32xf32, #tpu.memory_space<vmem>>) attributes {dimension_semantics = [], scalar_prefetch = 0 : i64, scratch_operands = 0 : i64, tpu.core_type = #tpu.core_type<tc>} {
    %c0 = arith.constant 0 : index
    %c0_0 = arith.constant 0 : index
    %0 = vector.load %arg0[%c0, %c0_0] : memref<8x32xf32, #tpu.memory_space<vmem>>, vector<8x32xf32>
    %c0_1 = arith.constant 0 : index
    %c0_2 = arith.constant 0 : index
    %1 = vector.load %arg1[%c0_1, %c0_2] : memref<32x64xf32, #tpu.memory_space<vmem>>, vector<32x64xf32>
    %c0_3 = arith.constant 0 : index
    %c0_4 = arith.constant 0 : index
    %2 = vector.load %arg2[%c0_3, %c0_4] : memref<1x64xf32, #tpu.memory_space<vmem>>, vector<1x64xf32>
    %cst = arith.constant dense<0.000000e+00> : vector<8x64xf32>
    %3 = tpu.matmul %0, %1, %cst {dimension_numbers = #tpu.dot_dimension_numbers<[1], [0], [0], [1], [0, 0, 1, 1], [], []>} : vector<8x32xf32>, vector<32x64xf32>, vector<8x64xf32> -> vector<8x64xf32>
    %4 = vector.broadcast %2 : vector<1x64xf32> to vector<8x64xf32>
    %5 = arith.addf %3, %4 : vector<8x64xf32>
    %cst_5 = arith.constant 0.000000e+00 : f32
    %6 = vector.broadcast %cst_5 : f32 to vector<8x64xf32>
    %7 = arith.maximumf %5, %6 : vector<8x64xf32>
    %c0_6 = arith.constant 0 : index
    %c0_7 = arith.constant 0 : index
    %8 = vector.load %arg3[%c0_6, %c0_7] : memref<64x32xf32, #tpu.memory_space<vmem>>, vector<64x32xf32>
    %c0_8 = arith.constant 0 : index
    %c0_9 = arith.constant 0 : index
    %9 = vector.load %arg4[%c0_8, %c0_9] : memref<1x32xf32, #tpu.memory_space<vmem>>, vector<1x32xf32>
    %cst_10 = arith.constant dense<0.000000e+00> : vector<8x32xf32>
    %10 = tpu.matmul %7, %8, %cst_10 {dimension_numbers = #tpu.dot_dimension_numbers<[1], [0], [0], [1], [0, 0, 1, 1], [], []>} : vector<8x64xf32>, vector<64x32xf32>, vector<8x32xf32> -> vector<8x32xf32>
    %11 = vector.broadcast %9 : vector<1x32xf32> to vector<8x32xf32>
    %12 = arith.addf %10, %11 : vector<8x32xf32>
    %cst_11 = arith.constant 0.000000e+00 : f32
    %13 = vector.broadcast %cst_11 : f32 to vector<8x32xf32>
    %14 = arith.maximumf %12, %13 : vector<8x32xf32>
    %c0_12 = arith.constant 0 : index
    %c0_13 = arith.constant 0 : index
    %15 = vector.load %arg5[%c0_12, %c0_13] : memref<8x32xf32, #tpu.memory_space<vmem>>, vector<8x32xf32>
    tpu.vector_store %arg5[%c0_12, %c0_13], %14 {strides = array<i32>} : memref<8x32xf32, #tpu.memory_space<vmem>>, vector<8x32xf32>,
    return
  }
}

</mosaic_0001>

<llo_original>
// kernel: implicit_interaction_forward.1
$region0: #{implicit_interaction_forward.1}
  #allocation0 [shape = 'u32[]', space=smem, size = 0x4, offset = 0x4, fixed_abs, tag = 'smem constant byte address 0x4 - core index']
  #allocation1 [shape = 'u32[144,128]{1,0:T(1,128)}', space=vmem, size = 0x12000, scoped, tag = 'internal scratch']
  %s0 = inlined_call_operand.vmem [shape: f32[8,32], index: 0, kind: input, shape index: {}]
  %s1 = inlined_call_operand.vmem [shape: f32[32,64], index: 1, kind: input, shape index: {}]
  %s2 = inlined_call_operand.vmem [shape: f32[1,64], index: 2, kind: input, shape index: {}]
  %s3 = inlined_call_operand.vmem [shape: f32[64,32], index: 3, kind: input, shape index: {}]
  %s4 = inlined_call_operand.vmem [shape: f32[1,32], index: 4, kind: input, shape index: {}]
  %s5 = inlined_call_operand.hbm [shape: f32[8,32], index: 5, kind: output, shape index: {}]
  %s6 = sld [smem:[#allocation0]]
  $region30: #{implicit_interaction_forward.1} parent=0
    _
  %s8 = ssub.s32 1, %s6
  %s9 = scalar_select 0, %s8, %s6
  $region1: #{implicit_interaction_forward.1} parent=0
    #allocation2 [shape = 'u8[4096]{0}', space=vmem, size = 0x1000, scoped, tag = 'output window, operand 0, single buffered']
    #allocation3 [shape = 's32[1]{0}', space=sflag, size = 0x4, scoped, tag = 'scoped memory for implicit_interaction_forward.1']
    %10 = vsyncpa [#allocation3], 0
    // Predicated region
    $region2: #{implicit_interaction_forward.1} parent=1 // pred_check
      _
    $region3: #{implicit_interaction_forward.1} parent=1 // pred_check_branch
      %12 = sbr.rel (0) target = $region5
    $region4: #{implicit_interaction_forward.1} parent=1 // pred_region
      _
    $region5: #{implicit_interaction_forward.1} parent=1 // pred_fallthru
      _
    // Predicated region
    $region6: #{implicit_interaction_forward.1} parent=1 // pred_check
      _
    $region7: #{implicit_interaction_forward.1} parent=1 // pred_check_branch
      %14 = sbr.rel (0) target = $region9
    $region8: #{implicit_interaction_forward.1} parent=1 // pred_region
      _
    $region9: #{implicit_interaction_forward.1} parent=1 // pred_fallthru
      _
    // Predicated region
    $region10: #{implicit_interaction_forward.1} parent=1 // pred_check
      _
    $region11: #{implicit_interaction_forward.1} parent=1 // pred_check_branch
      %16 = sbr.rel (0) target = $region13
    $region12: #{implicit_interaction_forward.1} parent=1 // pred_region
      _
    $region13: #{implicit_interaction_forward.1} parent=1 // pred_fallthru
      _
    // Predicated region
    $region14: #{implicit_interaction_forward.1} parent=1 // pred_check
      _
    $region15: #{implicit_interaction_forward.1} parent=1 // pred_check_branch
      %18 = sbr.rel (0) target = $region17
    $region16: #{implicit_interaction_forward.1} parent=1 // pred_region
      _
    $region17: #{implicit_interaction_forward.1} parent=1 // pred_fallthru
      _
    // Predicated region
    $region18: #{implicit_interaction_forward.1} parent=1 // pred_check
      _
    $region19: #{implicit_interaction_forward.1} parent=1 // pred_check_branch
      %20 = sbr.rel (0) target = $region21
    $region20: #{implicit_interaction_forward.1} parent=1 // pred_region
      _
    $region21: #{implicit_interaction_forward.1} parent=1 // pred_fallthru
      _
    %v21 = vld [vmem:[%s0] sm:$0xff]
    %v22 = vld [vmem:[%s1] sm:$0xff]
    %v23 = vld [vmem:[%s1 + $0x8] sm:$0xff]
    %v24 = vld [vmem:[%s1 + $0x10] sm:$0xff]
    %v25 = vld [vmem:[%s1 + $0x18] sm:$0xff]
    %v26 = vld [vmem:[%s2] sm:$0x1]
    %v28 = vlaneseq
    %v29 = vshrl.u32 %v28, 7
    %v30 = vsub.s32 0, %v29
    %v31 = vrot.slane %v26, %v30
    %vm33 = vcmask 261120
    %v35 = vsel %vm33, %v21, 0
    %37 = vmatprep.subr.mxu0 0.0
    %38 = vmatpush1.msra.mxu0 %v22
    %39 = vmatprep.subr.mxu0 0.0
    %40 = vmatpush1.msra.mxu0 %v23
    %41 = vmatprep.subr.mxu0 0.0
    %42 = vmatpush1.msra.mxu0 %v24
    %43 = vmatprep.subr.mxu0 0.0
    %44 = vmatpush1.msra.mxu0 %v25
    %45 = vmatprep.subr.mxu0 0.0
    %46 = vmatpush1.msra.mxu0 0.0
    %47 = vmatprep.subr.mxu0 0.0
    %48 = vmatpush1.msra.mxu0 0.0
    %49 = vmatprep.subr.mxu0 0.0
    %50 = vmatpush1.msra.mxu0 0.0
    %51 = vmatprep.subr.mxu0 0.0
    %52 = vmatpush1.msra.mxu0 0.0
    %53 = vmatprep.subr.mxu0 0.0
    %54 = vmatpush1.msra.mxu0 0.0
    %55 = vmatprep.subr.mxu0 0.0
    %56 = vmatpush1.msra.mxu0 0.0
    %57 = vmatprep.subr.mxu0 0.0
    %58 = vmatpush1.msra.mxu0 0.0
    %59 = vmatprep.subr.mxu0 0.0
    %60 = vmatpush1.msra.mxu0 0.0
    %61 = vmatprep.subr.mxu0 0.0
    %62 = vmatpush1.msra.mxu0 0.0
    %63 = vmatprep.subr.mxu0 0.0
    %64 = vmatpush1.msra.mxu0 0.0
    %65 = vmatprep.subr.mxu0 0.0
    %66 = vmatpush1.msra.mxu0 0.0
    %67 = vmatprep.subr.mxu0 0.0
    %68 = vmatpush1.msra.mxu0 0.0
    %69 = vmatprep.subr.mxu0 0.0
    %70 = vmatpush1.msra.mxu0 0.0
    %71 = vmatprep.subr.mxu0 0.0
    %72 = vmatpush1.msra.mxu0 0.0
    %73 = vmatprep.subr.mxu0 0.0
    %74 = vmatpush1.msra.mxu0 0.0
    %75 = vmatprep.subr.mxu0 0.0
    %76 = vmatpush1.msra.mxu0 0.0
    %77 = vmatprep.subr.mxu0 0.0
    %78 = vmatpush1.msra.mxu0 0.0
    %79 = vmatprep.subr.mxu0 0.0
    %80 = vmatpush1.msra.mxu0 0.0
    %81 = vmatprep.subr.mxu0 0.0
    %82 = vmatpush1.msra.mxu0 0.0
    %83 = vmatprep.subr.mxu0 0.0
    %84 = vmatpush1.msra.mxu0 0.0
    %85 = vmatprep.subr.mxu0 0.0
    %86 = vmatpush1.msra.mxu0 0.0
    %87 = vmatprep.subr.mxu0 0.0
    %88 = vmatpush1.msra.mxu0 0.0
    %89 = vmatprep.subr.mxu0 0.0
    %90 = vmatpush1.msra.mxu0 0.0
    %91 = vmatprep.subr.mxu0 0.0
    %92 = vmatpush1.msra.mxu0 0.0
    %93 = vmatprep.subr.mxu0 0.0
    %94 = vmatpush1.msra.mxu0 0.0
    %95 = vmatprep.subr.mxu0 0.0
    %96 = vmatpush1.msra.mxu0 0.0
    %97 = vmatprep.subr.mxu0 0.0
    %98 = vmatpush1.msra.mxu0 0.0
    %99 = vmatprep.subr.mxu0 0.0
    %100 = vmatpush1.msra.mxu0 0.0
    %101 = vmatprep.mubr.f32.mxu0 0.0
    %102 = vmatmul.mubr.f32.gmra.mrb[0].mxu0 %v35
    %v103 = vpop.f32.mrb[0].mxu0
    %v104 = vadd.f32 %v31, %v103
    %v105 = vpop.f32.mrb[0].mxu0
    %106 = vdwg.mxu0
    %v107 = vmax.f32 %v104, 0.0
    %v108 = vld [vmem:[%s3] sm:$0xff]
    %v109 = vld [vmem:[%s3 + $0x8] sm:$0xff]
    %v110 = vld [vmem:[%s3 + $0x10] sm:$0xff]
    %v111 = vld [vmem:[%s3 + $0x18] sm:$0xff]
    %v112 = vld [vmem:[%s3 + $0x20] sm:$0xff]
    %v113 = vld [vmem:[%s3 + $0x28] sm:$0xff]
    %v114 = vld [vmem:[%s3 + $0x30] sm:$0xff]
    %v115 = vld [vmem:[%s3 + $0x38] sm:$0xff]
    %v116 = vld [vmem:[%s4] sm:$0x1]
    %v118 = vlaneseq
    %v119 = vshrl.u32 %v118, 7
    %v120 = vsub.s32 0, %v119
    %v121 = vrot.slane %v116, %v120
    %vm123 = vcmask 523264
    %v125 = vsel %vm123, %v107, 0
    %127 = vmatprep.subr.mxu0 0.0
    %128 = vmatpush1.msra.mxu0 %v108
    %129 = vmatprep.subr.mxu0 0.0
    %130 = vmatpush1.msra.mxu0 %v109
    %131 = vmatprep.subr.mxu0 0.0
    %132 = vmatpush1.msra.mxu0 %v110
    %133 = vmatprep.subr.mxu0 0.0
    %134 = vmatpush1.msra.mxu0 %v111
    %135 = vmatprep.subr.mxu0 0.0
    %136 = vmatpush1.msra.mxu0 %v112
    %137 = vmatprep.subr.mxu0 0.0
    %138 = vmatpush1.msra.mxu0 %v113
    %139 = vmatprep.subr.mxu0 0.0
    %140 = vmatpush1.msra.mxu0 %v114
    %141 = vmatprep.subr.mxu0 0.0
    %142 = vmatpush1.msra.mxu0 %v115
    %143 = vmatprep.subr.mxu0 0.0
    %144 = vmatpush1.msra.mxu0 0.0
    %145 = vmatprep.subr.mxu0 0.0
    %146 = vmatpush1.msra.mxu0 0.0
    %147 = vmatprep.subr.mxu0 0.0
    %148 = vmatpush1.msra.mxu0 0.0
    %149 = vmatprep.subr.mxu0 0.0
    %150 = vmatpush1.msra.mxu0 0.0
    %151 = vmatprep.subr.mxu0 0.0
    %152 = vmatpush1.msra.mxu0 0.0
    %153 = vmatprep.subr.mxu0 0.0
    %154 = vmatpush1.msra.mxu0 0.0
    %155 = vmatprep.subr.mxu0 0.0
    %156 = vmatpush1.msra.mxu0 0.0
    %157 = vmatprep.subr.mxu0 0.0
    %158 = vmatpush1.msra.mxu0 0.0
    %159 = vmatprep.subr.mxu0 0.0
    %160 = vmatpush1.msra.mxu0 0.0
    %161 = vmatprep.subr.mxu0 0.0
    %162 = vmatpush1.msra.mxu0 0.0
    %163 = vmatprep.subr.mxu0 0.0
    %164 = vmatpush1.msra.mxu0 0.0
    %165 = vmatprep.subr.mxu0 0.0
    %166 = vmatpush1.msra.mxu0 0.0
    %167 = vmatprep.subr.mxu0 0.0
    %168 = vmatpush1.msra.mxu0 0.0
    %169 = vmatprep.subr.mxu0 0.0
    %170 = vmatpush1.msra.mxu0 0.0
    %171 = vmatprep.subr.mxu0 0.0
    %172 = vmatpush1.msra.mxu0 0.0
    %173 = vmatprep.subr.mxu0 0.0
    %174 = vmatpush1.msra.mxu0 0.0
    %175 = vmatprep.subr.mxu0 0.0
    %176 = vmatpush1.msra.mxu0 0.0
    %177 = vmatprep.subr.mxu0 0.0
    %178 = vmatpush1.msra.mxu0 0.0
    %179 = vmatprep.subr.mxu0 0.0
    %180 = vmatpush1.msra.mxu0 0.0
    %181 = vmatprep.subr.mxu0 0.0
    %182 = vmatpush1.msra.mxu0 0.0
    %183 = vmatprep.subr.mxu0 0.0
    %184 = vmatpush1.msra.mxu0 0.0
    %185 = vmatprep.subr.mxu0 0.0
    %186 = vmatpush1.msra.mxu0 0.0
    %187 = vmatprep.subr.mxu0 0.0
    %188 = vmatpush1.msra.mxu0 0.0
    %189 = vmatprep.subr.mxu0 0.0
    %190 = vmatpush1.msra.mxu0 0.0
    %191 = vmatprep.mubr.f32.mxu0 0.0
    %192 = vmatmul.mubr.f32.gmra.mrb[0].mxu0 %v125
    %v193 = vpop.f32.mrb[0].mxu0
    %v194 = vadd.f32 %v121, %v193
    %v195 = vpop.f32.mrb[0].mxu0
    %196 = vdwg.mxu0
    %v197 = vmax.f32 %v194, 0.0
    %198 = vst.msk [vmem:[#allocation2] sm:$0xff] %vm33, %v197
    // Predicated region
    $region22: #{implicit_interaction_forward.1} parent=1 // pred_check
      _
    $region23: #{implicit_interaction_forward.1} parent=1 // pred_check_branch
      %200 = sbr.rel (0) target = $region25
    $region24: #{implicit_interaction_forward.1} parent=1 // pred_region
      %s202 = ssub.s32 128, 128
      %203 = vsyncadd [#allocation3], %s202
      %s205 = sshll.u32 [#allocation2], 4
      %s206 = int_to_ptr.vmem [resolvable:$true] %s205
      %208 = dma.vmem_to_hbm [thread:$0]  %s206, 128, %s5, [#allocation3]
    $region25: #{implicit_interaction_forward.1} parent=1 // pred_fallthru
      _
    // Predicated region
    $region26: #{implicit_interaction_forward.1} parent=1 // pred_check
      _
    $region27: #{implicit_interaction_forward.1} parent=1 // pred_check_branch
      %210 = sbr.rel (0) target = $region29
    $region28: #{implicit_interaction_forward.1} parent=1 // pred_region
      %211 = dma.done [#allocation3], 128
    $region29: #{implicit_interaction_forward.1} parent=1 // pred_fallthru
      _
    %212 = vsyncpa [#allocation3], 1

</llo_original>
